<compile_context>
chip_gen: v5e
topology: v5e:2x2
jax: 0.10.0
libtpu: 0.0.40
codegen_flags: <defaults>
</compile_context>

<pallas_src>
import numpy as np
import jax
import jax.numpy as jnp
from jax.experimental import pallas as pl
from jax.experimental.pallas import tpu as pltpu


def _round_up(a, b):
    return (a + b - 1) // b * b


def attention_kernel(x_ref, w_ref, q_ref, e_ref, o_ref):
    """x_ref:(TN,S*D)  w_ref:(S*D,S*D)  q_ref:(S*D,S*H)  e_ref:(H,D)  o_ref:(TN,D)."""
    num_heads, input_dim = e_ref.shape
    split = x_ref.shape[1] // input_dim
    H, D, S = num_heads, input_dim, split

    x2d = x_ref[...]                                                         # (TN, S*D)

    # One lane-dense projection for all heads and all splits (K = S*D).
    x_all = jnp.dot(x2d, w_ref[...], preferred_element_type=jnp.float32)     # (TN, S*D)

    # Per-split / per-head attention logits (K = S*D): sc[n, s*H + h].
    sc = jnp.dot(x_all, q_ref[...], preferred_element_type=jnp.float32)      # (TN, S*H)

    # LeakyReLU(negative_slope=0.2)
    sc = jnp.where(sc > 0, sc, 0.2 * sc)

    # Softmax over the split axis, statically unrolled over s on narrow (TN,H) slices.
    m = sc[:, 0:H]
    for s in range(1, S):
        m = jnp.maximum(m, sc[:, s * H:(s + 1) * H])
    exs = [jnp.exp(sc[:, s * H:(s + 1) * H] - m) for s in range(S)]
    denom = exs[0]
    for s in range(1, S):
        denom = denom + exs[s]
    inv = pl.reciprocal(denom, approx=True)       # EUP slot (off the VALU)
    inv = inv * (2.0 - denom * inv)               # one Newton step -> full f32 accuracy

    # Weighted sum over the split axis: broadcast each head's weight to its per_dim
    # columns with a tiny constant matmul, then VPU multiply-accumulate per split.
    e = e_ref[...]
    acc = None
    for s in range(S):
        att_s = exs[s] * inv                                                 # (TN, H)
        att_rep = jnp.dot(att_s, e, preferred_element_type=jnp.float32)      # (TN, D)
        term = att_rep * x_all[:, s * D:(s + 1) * D]                         # (TN, D)
        acc = term if acc is None else acc + term
    o_ref[...] = acc.astype(o_ref.dtype)                                     # (TN, D)


def attention_module_pallas(x, w_bd, q_big, e_mat, *, block_rows=1024):
    """x: (N, split*input_dim) float32 -> (N, input_dim) float32."""
    n = x.shape[0]
    sd = w_bd.shape[0]
    sh = q_big.shape[1]
    num_heads, input_dim = e_mat.shape
    assert x.shape[1] == sd, "x second dim must be split*input_dim"

    # Row tile: multiple of 8 (sublane), capped by block_rows; pad N to a multiple.
    tn = _round_up(min(block_rows, _round_up(n, 8)), 8)
    n_pad = _round_up(n, tn)
    if n_pad != n:
        x = jnp.pad(x, ((0, n_pad - n), (0, 0)))

    out = pl.pallas_call(
        attention_kernel,
        out_shape=jax.ShapeDtypeStruct((n_pad, input_dim), jnp.float32),
        grid=(n_pad // tn,),
        in_specs=[
            pl.BlockSpec((tn, sd), lambda i: (i, 0)),               # x tiles stream over N
            pl.BlockSpec((sd, sd), lambda i: (0, 0)),               # fused weights stay resident
            pl.BlockSpec((sd, sh), lambda i: (0, 0)),
            pl.BlockSpec((num_heads, input_dim), lambda i: (0, 0)),
        ],
        out_specs=pl.BlockSpec((tn, input_dim), lambda i: (i, 0)),
        compiler_params=pltpu.CompilerParams(
            dimension_semantics=("parallel",)),                     # megacore-shard N on v7x
    )(x, w_bd, q_big, e_mat)
    return out[:n]


def attention_module_ref(x, w_list, q_list, split, input_dim):
    """Pure-JAX mirror of the PyTorch forward (per-head loop)."""
    N = x.shape[0]
    x3 = x.reshape(N, split, input_dim)
    outs = []
    for W, q in zip(w_list, q_list):
        x_ = x3 @ W                                  # (N, S, P)
        att = x_ @ q                                 # (N, S, 1)
        att = jnp.where(att > 0, att, 0.2 * att)
        att = jax.nn.softmax(att, axis=1)
        outs.append(jnp.sum(x_ * jnp.broadcast_to(att, x_.shape), axis=1))   # (N, P)
    return jnp.concatenate(outs, axis=1)


def build_params(key, input_dim, num_heads):
    """Deterministic glorot/xavier-style init matching the module's shapes."""
    per_dim = input_dim // num_heads
    w_list, q_list = [], []
    for _ in range(num_heads):
        key, kw, kq = jax.random.split(key, 3)
        bound_w = float(np.sqrt(6.0 / (input_dim + per_dim)))
        W = jax.random.uniform(kw, (input_dim, per_dim), jnp.float32, -bound_w, bound_w)
        bound_q = float(1.414 * np.sqrt(6.0 / (per_dim + 1)))
        q = jax.random.uniform(kq, (per_dim, 1), jnp.float32, -bound_q, bound_q)
        w_list.append(W)
        q_list.append(q)
    return w_list, q_list


def fuse_params(w_list, q_list, split):
    """Build the fused block-diagonal matrices used by the lane-dense kernel."""
    input_dim = w_list[0].shape[0]
    num_heads = len(w_list)
    per_dim = input_dim // num_heads

    w_cat = np.concatenate([np.asarray(w) for w in w_list], axis=1)          # (D, D)
    q_cat = np.zeros((input_dim, num_heads), np.float32)                     # (D, H)
    for h in range(num_heads):
        q_cat[h * per_dim:(h + 1) * per_dim, h] = np.asarray(q_list[h])[:, 0]

    eye_s = np.eye(split, dtype=np.float32)
    w_bd = np.kron(eye_s, w_cat).astype(np.float32)                          # (S*D, S*D)
    q_big = np.kron(eye_s, q_cat).astype(np.float32)                         # (S*D, S*H)
    e_mat = np.kron(np.eye(num_heads, dtype=np.float32),
                    np.ones((1, per_dim), np.float32)).astype(np.float32)    # (H, D)
    return jnp.asarray(w_bd), jnp.asarray(q_big), jnp.asarray(e_mat)


if __name__ == "__main__":
    # Small demo shapes consistent with the module.
    N = 40             # deliberately not a multiple of the row tile -> exercises padding
    input_dim = 32
    num_heads = 4
    split = 4          # x is (N, split*input_dim); split*input_dim = 128 lanes
    block_rows = 16    # small tile so the demo runs a multi-step pipelined grid
                       # (use 512-2048 rows for real workloads; per-tile VMEM is tiny)

    key = jax.random.PRNGKey(0)
    key, kx = jax.random.split(key)
    x = jax.random.normal(kx, (N, split * input_dim), jnp.float32)

    w_list, q_list = build_params(key, input_dim, num_heads)
    w_bd, q_big, e_mat = fuse_params(w_list, q_list, split)

    out = attention_module_pallas(x, w_bd, q_big, e_mat, block_rows=block_rows)
    out = jax.block_until_ready(out)

    ref = attention_module_ref(x, w_list, q_list, split, input_dim)
    np.testing.assert_allclose(np.asarray(out), np.asarray(ref),
                               rtol=1e-4, atol=1e-4)

    print("KERNEL_OK")
</pallas_src>

<mosaic_0001>
module attributes {stable_mosaic.version = 11 : i64} {
  func.func @attention_kernel(%arg0: i32, %arg1: memref<16x128xf32, #tpu.memory_space<vmem>>, %arg2: memref<128x128xf32, #tpu.memory_space<vmem>>, %arg3: memref<128x16xf32, #tpu.memory_space<vmem>>, %arg4: memref<4x32xf32, #tpu.memory_space<vmem>>, %arg5: memref<16x32xf32, #tpu.memory_space<vmem>>) attributes {dimension_semantics = [#tpu.dimension_semantics<parallel>], iteration_bounds = array<i64: 3>, scalar_prefetch = 0 : i64, scratch_operands = 0 : i64, tpu.core_type = #tpu.core_type<tc>, window_params = [{transform_indices = @transform_0, window_bounds = array<i64: 16, 128>}, {pipeline_mode = #tpu.pipeline_mode<synchronous>, transform_indices = @transform_1, window_bounds = array<i64: 128, 128>}, {pipeline_mode = #tpu.pipeline_mode<synchronous>, transform_indices = @transform_2, window_bounds = array<i64: 128, 16>}, {pipeline_mode = #tpu.pipeline_mode<synchronous>, transform_indices = @transform_3, window_bounds = array<i64: 4, 32>}, {transform_indices = @transform_4, window_bounds = array<i64: 16, 32>}]} {
    %c0 = arith.constant 0 : index
    %c0_0 = arith.constant 0 : index
    %0 = vector.load %arg1[%c0, %c0_0] : memref<16x128xf32, #tpu.memory_space<vmem>>, vector<16x128xf32>
    %c0_1 = arith.constant 0 : index
    %c0_2 = arith.constant 0 : index
    %1 = vector.load %arg2[%c0_1, %c0_2] : memref<128x128xf32, #tpu.memory_space<vmem>>, vector<128x128xf32>
    %cst = arith.constant dense<0.000000e+00> : vector<16x128xf32>
    %2 = tpu.matmul %0, %1, %cst {dimension_numbers = #tpu.dot_dimension_numbers<[1], [0], [0], [1], [0, 0, 1, 1], [], []>} : vector<16x128xf32>, vector<128x128xf32>, vector<16x128xf32> -> vector<16x128xf32>
    %c0_3 = arith.constant 0 : index
    %c0_4 = arith.constant 0 : index
    %3 = vector.load %arg3[%c0_3, %c0_4] : memref<128x16xf32, #tpu.memory_space<vmem>>, vector<128x16xf32>
    %cst_5 = arith.constant dense<0.000000e+00> : vector<16x16xf32>
    %4 = tpu.matmul %2, %3, %cst_5 {dimension_numbers = #tpu.dot_dimension_numbers<[1], [0], [0], [1], [0, 0, 1, 1], [], []>} : vector<16x128xf32>, vector<128x16xf32>, vector<16x16xf32> -> vector<16x16xf32>
    %cst_6 = arith.constant 0.000000e+00 : f32
    %5 = vector.broadcast %cst_6 : f32 to vector<16x16xf32>
    %6 = arith.cmpf ogt, %4, %5 : vector<16x16xf32>
    %cst_7 = arith.constant 2.000000e-01 : f32
    %7 = vector.broadcast %cst_7 : f32 to vector<16x16xf32>
    %8 = arith.mulf %7, %4 : vector<16x16xf32>
    %9 = arith.select %6, %4, %8 : vector<16x16xi1>, vector<16x16xf32>
    %10 = vector.extract_strided_slice %9 {offsets = [0, 0], sizes = [16, 4], strides = [1, 1]} : vector<16x16xf32> to vector<16x4xf32>
    %11 = vector.extract_strided_slice %9 {offsets = [0, 4], sizes = [16, 4], strides = [1, 1]} : vector<16x16xf32> to vector<16x4xf32>
    %12 = arith.maximumf %10, %11 : vector<16x4xf32>
    %13 = vector.extract_strided_slice %9 {offsets = [0, 8], sizes = [16, 4], strides = [1, 1]} : vector<16x16xf32> to vector<16x4xf32>
    %14 = arith.maximumf %12, %13 : vector<16x4xf32>
    %15 = vector.extract_strided_slice %9 {offsets = [0, 12], sizes = [16, 4], strides = [1, 1]} : vector<16x16xf32> to vector<16x4xf32>
    %16 = arith.maximumf %14, %15 : vector<16x4xf32>
    %17 = vector.extract_strided_slice %9 {offsets = [0, 0], sizes = [16, 4], strides = [1, 1]} : vector<16x16xf32> to vector<16x4xf32>
    %18 = arith.subf %17, %16 : vector<16x4xf32>
    %19 = math.exp %18 : vector<16x4xf32>
    %20 = vector.extract_strided_slice %9 {offsets = [0, 4], sizes = [16, 4], strides = [1, 1]} : vector<16x16xf32> to vector<16x4xf32>
    %21 = arith.subf %20, %16 : vector<16x4xf32>
    %22 = math.exp %21 : vector<16x4xf32>
    %23 = vector.extract_strided_slice %9 {offsets = [0, 8], sizes = [16, 4], strides = [1, 1]} : vector<16x16xf32> to vector<16x4xf32>
    %24 = arith.subf %23, %16 : vector<16x4xf32>
    %25 = math.exp %24 : vector<16x4xf32>
    %26 = vector.extract_strided_slice %9 {offsets = [0, 12], sizes = [16, 4], strides = [1, 1]} : vector<16x16xf32> to vector<16x4xf32>
    %27 = arith.subf %26, %16 : vector<16x4xf32>
    %28 = math.exp %27 : vector<16x4xf32>
    %29 = arith.addf %19, %22 : vector<16x4xf32>
    %30 = arith.addf %29, %25 : vector<16x4xf32>
    %31 = arith.addf %30, %28 : vector<16x4xf32>
    %32 = tpu.reciprocal %31 {approx = true} : vector<16x4xf32> -> vector<16x4xf32>
    %33 = arith.mulf %31, %32 : vector<16x4xf32>
    %cst_8 = arith.constant 2.000000e+00 : f32
    %34 = vector.broadcast %cst_8 : f32 to vector<16x4xf32>
    %35 = arith.subf %34, %33 : vector<16x4xf32>
    %36 = arith.mulf %32, %35 : vector<16x4xf32>
    %c0_9 = arith.constant 0 : index
    %c0_10 = arith.constant 0 : index
    %37 = vector.load %arg4[%c0_9, %c0_10] : memref<4x32xf32, #tpu.memory_space<vmem>>, vector<4x32xf32>
    %38 = arith.mulf %19, %36 : vector<16x4xf32>
    %cst_11 = arith.constant dense<0.000000e+00> : vector<16x32xf32>
    %39 = tpu.matmul %38, %37, %cst_11 {dimension_numbers = #tpu.dot_dimension_numbers<[1], [0], [0], [1], [0, 0, 1, 1], [], []>} : vector<16x4xf32>, vector<4x32xf32>, vector<16x32xf32> -> vector<16x32xf32>
    %40 = vector.extract_strided_slice %2 {offsets = [0, 0], sizes = [16, 32], strides = [1, 1]} : vector<16x128xf32> to vector<16x32xf32>
    %41 = arith.mulf %39, %40 : vector<16x32xf32>
    %42 = arith.mulf %22, %36 : vector<16x4xf32>
    %cst_12 = arith.constant dense<0.000000e+00> : vector<16x32xf32>
    %43 = tpu.matmul %42, %37, %cst_12 {dimension_numbers = #tpu.dot_dimension_numbers<[1], [0], [0], [1], [0, 0, 1, 1], [], []>} : vector<16x4xf32>, vector<4x32xf32>, vector<16x32xf32> -> vector<16x32xf32>
    %44 = vector.extract_strided_slice %2 {offsets = [0, 32], sizes = [16, 32], strides = [1, 1]} : vector<16x128xf32> to vector<16x32xf32>
    %45 = arith.mulf %43, %44 : vector<16x32xf32>
    %46 = arith.addf %41, %45 : vector<16x32xf32>
    %47 = arith.mulf %25, %36 : vector<16x4xf32>
    %cst_13 = arith.constant dense<0.000000e+00> : vector<16x32xf32>
    %48 = tpu.matmul %47, %37, %cst_13 {dimension_numbers = #tpu.dot_dimension_numbers<[1], [0], [0], [1], [0, 0, 1, 1], [], []>} : vector<16x4xf32>, vector<4x32xf32>, vector<16x32xf32> -> vector<16x32xf32>
    %49 = vector.extract_strided_slice %2 {offsets = [0, 64], sizes = [16, 32], strides = [1, 1]} : vector<16x128xf32> to vector<16x32xf32>
    %50 = arith.mulf %48, %49 : vector<16x32xf32>
    %51 = arith.addf %46, %50 : vector<16x32xf32>
    %52 = arith.mulf %28, %36 : vector<16x4xf32>
    %cst_14 = arith.constant dense<0.000000e+00> : vector<16x32xf32>
    %53 = tpu.matmul %52, %37, %cst_14 {dimension_numbers = #tpu.dot_dimension_numbers<[1], [0], [0], [1], [0, 0, 1, 1], [], []>} : vector<16x4xf32>, vector<4x32xf32>, vector<16x32xf32> -> vector<16x32xf32>
    %54 = vector.extract_strided_slice %2 {offsets = [0, 96], sizes = [16, 32], strides = [1, 1]} : vector<16x128xf32> to vector<16x32xf32>
    %55 = arith.mulf %53, %54 : vector<16x32xf32>
    %56 = arith.addf %51, %55 : vector<16x32xf32>
    %c0_15 = arith.constant 0 : index
    %c0_16 = arith.constant 0 : index
    %57 = vector.load %arg5[%c0_15, %c0_16] : memref<16x32xf32, #tpu.memory_space<vmem>>, vector<16x32xf32>
    tpu.vector_store %arg5[%c0_15, %c0_16], %56 {strides = array<i32>} : memref<16x32xf32, #tpu.memory_space<vmem>>, vector<16x32xf32>,
    return
  }
  func.func @transform_0(%arg0: i32) -> (i32, i32) {
    %c0_i32 = arith.constant 0 : i32
    %c0_i32_0 = arith.constant 0 : i32
    return %arg0, %c0_i32 : i32, i32
  }
  func.func @transform_1(%arg0: i32) -> (i32, i32) {
    %c0_i32 = arith.constant 0 : i32
    %c0_i32_0 = arith.constant 0 : i32
    %c0_i32_1 = arith.constant 0 : i32
    return %c0_i32, %c0_i32_0 : i32, i32
  }
  func.func @transform_2(%arg0: i32) -> (i32, i32) {
    %c0_i32 = arith.constant 0 : i32
    %c0_i32_0 = arith.constant 0 : i32
    %c0_i32_1 = arith.constant 0 : i32
    return %c0_i32, %c0_i32_0 : i32, i32
  }
  func.func @transform_3(%arg0: i32) -> (i32, i32) {
    %c0_i32 = arith.constant 0 : i32
    %c0_i32_0 = arith.constant 0 : i32
    %c0_i32_1 = arith.constant 0 : i32
    return %c0_i32, %c0_i32_0 : i32, i32
  }
  func.func @transform_4(%arg0: i32) -> (i32, i32) {
    %c0_i32 = arith.constant 0 : i32
    %c0_i32_0 = arith.constant 0 : i32
    return %arg0, %c0_i32 : i32, i32
  }
}

</mosaic_0001>

<llo_original>
// kernel: tpu_custom_call.1
$region0: #{tpu_custom_call.1}
  #allocation0 [shape = 'u32[]', space=smem, size = 0x4, offset = 0x4, fixed_abs, tag = 'smem constant byte address 0x4 - core index']
  #allocation1 [shape = 'u32[72,128]{1,0:T(1,128)}', space=vmem, size = 0x9000, scoped, tag = 'internal scratch']
  %s0 = inlined_call_operand.hbm [shape: f32[48,128], index: 0, kind: input, shape index: {}]
  %s1 = inlined_call_operand.vmem [shape: f32[128,128], index: 1, kind: input, shape index: {}]
  %s2 = inlined_call_operand.vmem [shape: f32[128,16], index: 2, kind: input, shape index: {}]
  %s3 = inlined_call_operand.vmem [shape: f32[4,32], index: 3, kind: input, shape index: {}]
  %s4 = inlined_call_operand.vmem [shape: f32[48,32], index: 4, kind: output, shape index: {}]
  %s5 = sld [smem:[#allocation0]]
  $region53: #{tpu_custom_call.1} parent=0
    _
  %s7 = ssub.s32 1, %s5
  %s8 = scalar_select 0, %s7, %s5
  $region1: #{tpu_custom_call.1} parent=0
    #allocation2 [shape = 'u8[16384]{0}', space=vmem, size = 0x4000, scoped, tag = 'input window, operand 0']
    #allocation3 [shape = 's32[2]{0}', space=sflag, size = 0x8, scoped, tag = 'scoped memory for tpu_custom_call.1']
    %9 = vsyncpa [#allocation3], 0
    %s10 = scalar_lea.sflag [#allocation3], 1
    %11 = vsyncpa %s10, 0
    loop: start=0, step=1, limit=5
    $region2: #{tpu_custom_call.1} parent=1 // loop_pre_header
      _
    $region3: #{tpu_custom_call.1} parent=1 // loop_header
      %s13 = sphi 0, %s17
      %p14 = scmp.ge.s32.totalorder %s13, 5
      %s23 = sphi 0, %s25
      %s26 = sphi 0, %s23
      %s27 = sphi 0, %s26
      %s43 = sphi 0, %s27
      %s47 = sphi 0, %s47
      %s49 = sphi 0, %s47
      %s50 = sphi 0, %s49
      %s64 = sphi 0, %s50
      %s68 = sphi 0, %s68
      %s70 = sphi 0, %s68
      %s71 = sphi 0, %s70
      %s85 = sphi 0, %s71
      %s89 = sphi 0, %s89
      %s91 = sphi 0, %s89
      %s92 = sphi 0, %s91
      %s106 = sphi 0, %s92
      %s112 = sphi 0, %s114
      %s115 = sphi 0, %s112
      %s116 = sphi 0, %s115
      %s132 = sphi 0, %s116
    $region4: #{tpu_custom_call.1} parent=1 // loop_header_branch
      %16 = sbr.rel (%p14) target = $region8
    $region5: #{tpu_custom_call.1} parent=1 // loop_body
      %s18 = ssub.s32 %s13, 1
      %s19 = ssub.s32 %s13, 2
      %s20 = sadd.s32 %s13, 1
      %s21 = ssub.s32 %s13, %s20
      %p22 = scmp.eq.s32.totalorder %s21, 0
      %s24 = sadd.s32 %s23, 1
      %s25 = scalar_select %p22, %s23, %s24
      %p28 = pneg %p22
      %p29 = scmp.eq.s32.totalorder %s13, 2
      %p30 = por %p28, %p29
      %p31 = scmp.ne.s32.totalorder %s23, %s26
      %p32 = scmp.eq.s32.totalorder %s13, 0
      %p33 = por %p31, %p32
      %p34 = scmp.ne.s32.totalorder %s23, %s26
      %p35 = scmp.eq.s32.totalorder %s18, 2
      %p36 = por %p34, %p35
      %p37 = scmp.ne.s32.totalorder %s26, %s27
      %p38 = scmp.eq.s32.totalorder %s18, 0
      %p39 = por %p37, %p38
      %p40 = scmp.ne.s32.totalorder %s26, %s27
      %p41 = scmp.eq.s32.totalorder %s19, 2
      %p42 = por %p40, %p41
      %p44 = scmp.ne.s32.totalorder %s27, %s43
      %p45 = scmp.eq.s32.totalorder %s19, 0
      %p46 = por %p44, %p45
      %s48 = sadd.s32 %s47, 1
      %p51 = scmp.eq.s32.totalorder %s13, 2
      %p52 = scmp.ne.s32.totalorder %s47, %s49
      %p53 = scmp.eq.s32.totalorder %s13, 0
      %p54 = por %p52, %p53
      %p55 = scmp.ne.s32.totalorder %s47, %s49
      %p56 = scmp.eq.s32.totalorder %s18, 2
      %p57 = por %p55, %p56
      %p58 = scmp.ne.s32.totalorder %s49, %s50
      %p59 = scmp.eq.s32.totalorder %s18, 0
      %p60 = por %p58, %p59
      %p61 = scmp.ne.s32.totalorder %s49, %s50
      %p62 = scmp.eq.s32.totalorder %s19, 2
      %p63 = por %p61, %p62
      %p65 = scmp.ne.s32.totalorder %s50, %s64
      %p66 = scmp.eq.s32.totalorder %s19, 0
      %p67 = por %p65, %p66
      %s69 = sadd.s32 %s68, 1
      %p72 = scmp.eq.s32.totalorder %s13, 2
      %p73 = scmp.ne.s32.totalorder %s68, %s70
      %p74 = scmp.eq.s32.totalorder %s13, 0
      %p75 = por %p73, %p74
      %p76 = scmp.ne.s32.totalorder %s68, %s70
      %p77 = scmp.eq.s32.totalorder %s18, 2
      %p78 = por %p76, %p77
      %p79 = scmp.ne.s32.totalorder %s70, %s71
      %p80 = scmp.eq.s32.totalorder %s18, 0
      %p81 = por %p79, %p80
      %p82 = scmp.ne.s32.totalorder %s70, %s71
      %p83 = scmp.eq.s32.totalorder %s19, 2
      %p84 = por %p82, %p83
      %p86 = scmp.ne.s32.totalorder %s71, %s85
      %p87 = scmp.eq.s32.totalorder %s19, 0
      %p88 = por %p86, %p87
      %s90 = sadd.s32 %s89, 1
      %p93 = scmp.eq.s32.totalorder %s13, 2
      %p94 = scmp.ne.s32.totalorder %s89, %s91
      %p95 = scmp.eq.s32.totalorder %s13, 0
      %p96 = por %p94, %p95
      %p97 = scmp.ne.s32.totalorder %s89, %s91
      %p98 = scmp.eq.s32.totalorder %s18, 2
      %p99 = por %p97, %p98
      %p100 = scmp.ne.s32.totalorder %s91, %s92
      %p101 = scmp.eq.s32.totalorder %s18, 0
      %p102 = por %p100, %p101
      %p103 = scmp.ne.s32.totalorder %s91, %s92
      %p104 = scmp.eq.s32.totalorder %s19, 2
      %p105 = por %p103, %p104
      %p107 = scmp.ne.s32.totalorder %s92, %s106
      %p108 = scmp.eq.s32.totalorder %s19, 0
      %p109 = por %p107, %p108
      %s110 = ssub.s32 %s13, %s20
      %p111 = scmp.eq.s32.totalorder %s110, 0
      %s113 = sadd.s32 %s112, 1
      %s114 = scalar_select %p111, %s112, %s113
      %p117 = pneg %p111
      %p118 = scmp.eq.s32.totalorder %s13, 2
      %p119 = por %p117, %p118
      %p120 = scmp.ne.s32.totalorder %s112, %s115
      %p121 = scmp.eq.s32.totalorder %s13, 0
      %p122 = por %p120, %p121
      %p123 = scmp.ne.s32.totalorder %s112, %s115
      %p124 = scmp.eq.s32.totalorder %s18, 2
      %p125 = por %p123, %p124
      %p126 = scmp.ne.s32.totalorder %s115, %s116
      %p127 = scmp.eq.s32.totalorder %s18, 0
      %p128 = por %p126, %p127
      %p129 = scmp.ne.s32.totalorder %s115, %s116
      %p130 = scmp.eq.s32.totalorder %s19, 2
      %p131 = por %p129, %p130
      %p133 = scmp.ne.s32.totalorder %s116, %s132
      %p134 = scmp.eq.s32.totalorder %s19, 0
      %p135 = por %p133, %p134
      %p136 = scmp.le.s32.totalorder 1, %s13
      %p137 = scmp.lt.s32.totalorder %s13, 4
      %p138 = pnand %p136, %p137
      %p139 = pneg %p138
      // Predicated region
      $region9: #{tpu_custom_call.1} parent=5 // pred_check
        _
      $region10: #{tpu_custom_call.1} parent=5 // pred_check_branch
        %141 = sbr.rel (%p138) target = $region12
      $region11: #{tpu_custom_call.1} parent=5 // pred_region
        %s142 = ssub.s32 %s13, 1
        // Predicated region
        $region13: #{tpu_custom_call.1} parent=11 // pred_check
          %p143 = pneg %p60
        $region14: #{tpu_custom_call.1} parent=11 // pred_check_branch
          %145 = sbr.rel (%p143) target = $region16
        $region15: #{tpu_custom_call.1} parent=11 // pred_region
          _
        $region16: #{tpu_custom_call.1} parent=11 // pred_fallthru
          _
        // Predicated region
        $region17: #{tpu_custom_call.1} parent=11 // pred_check
          %p146 = pneg %p81
        $region18: #{tpu_custom_call.1} parent=11 // pred_check_branch
          %148 = sbr.rel (%p146) target = $region20
        $region19: #{tpu_custom_call.1} parent=11 // pred_region
          _
        $region20: #{tpu_custom_call.1} parent=11 // pred_fallthru
          _
        // Predicated region
        $region21: #{tpu_custom_call.1} parent=11 // pred_check
          %p149 = pneg %p102
        $region22: #{tpu_custom_call.1} parent=11 // pred_check_branch
          %151 = sbr.rel (%p149) target = $region24
        $region23: #{tpu_custom_call.1} parent=11 // pred_region
          _
        $region24: #{tpu_custom_call.1} parent=11 // pred_fallthru
          _
      $region12: #{tpu_custom_call.1} parent=5 // pred_fallthru
        _
      %p152 = scmp.lt.s32.totalorder %s13, 3
      // Predicated region
      $region25: #{tpu_custom_call.1} parent=5 // pred_check
        %p153 = pneg %p152
      $region26: #{tpu_custom_call.1} parent=5 // pred_check_branch
        %155 = sbr.rel (%p153) target = $region28
      $region27: #{tpu_custom_call.1} parent=5 // pred_region
        // Predicated region
        $region29: #{tpu_custom_call.1} parent=27 // pred_check
          %p156 = pneg %p33
        $region30: #{tpu_custom_call.1} parent=27 // pred_check_branch
          %158 = sbr.rel (%p156) target = $region32
        $region31: #{tpu_custom_call.1} parent=27 // pred_region
          %s159 = sand.u32 %s23, 1
          %s160 = scalar_lea.sflag [#allocation3], %s159
          %s161 = sand.u32 %s23, 1
          %s162 = smul.addr %s161, 16
          %s163 = scalar_lea.vmem [#allocation2], %s162
          %s164 = smul.u32 2, %s13
          %166 = vsyncadd %s160, 0
          %s167 = smul.addr %s164, 8
          %s168 = scalar_lea.hbm %s0, %s167
          %s169 = sshll.u32 %s168, 4
          %s170 = int_to_ptr.hbm [resolvable:$true] %s169
          %s171 = sshll.u32 %s163, 4
          %s172 = int_to_ptr.vmem [resolvable:$true] %s171
          %177 = dma.hbm_to_vmem [thread:$0]  %s170, 256, %s172, %s160, 128, 128, 8
        $region32: #{tpu_custom_call.1} parent=27 // pred_fallthru
          _
      $region28: #{tpu_custom_call.1} parent=5 // pred_fallthru
        _
      %p178 = scmp.le.s32.totalorder 1, %s13
      %p179 = scmp.lt.s32.totalorder %s13, 4
      %p180 = pnand %p178, %p179
      %p181 = pneg %p180
      // Predicated region
      $region33: #{tpu_custom_call.1} parent=5 // pred_check
        _
      $region34: #{tpu_custom_call.1} parent=5 // pred_check_branch
        %183 = sbr.rel (%p180) target = $region36
      $region35: #{tpu_custom_call.1} parent=5 // pred_region
        %s184 = ssub.s32 %s13, 1
        %s185 = sand.u32 %s26, 1
        %s186 = scalar_lea.sflag [#allocation3], %s185
        %s187 = sand.u32 %s26, 1
        %s188 = smul.addr %s187, 16
        %s189 = scalar_lea.vmem [#allocation2], %s188
        // Predicated region
        $region37: #{tpu_custom_call.1} parent=35 // pred_check
          %p190 = pneg %p39
        $region38: #{tpu_custom_call.1} parent=35 // pred_check_branch
          %192 = sbr.rel (%p190) target = $region40
        $region39: #{tpu_custom_call.1} parent=35 // pred_region
          %194 = dma.done %s186, 256
        $region40: #{tpu_custom_call.1} parent=35 // pred_fallthru
          _
        %s195 = sand.u32 %s26, 1
        %s196 = scalar_lea.sflag [#allocation3], %s195
        %s197 = sand.u32 %s26, 1
        %s198 = smul.addr %s197, 16
        %s199 = scalar_lea.vmem [#allocation2], %s198
        %p200 = pneg %p39
        %p201 = pneg %p36
        %p202 = pneg %p60
        %p203 = pneg %p57
        %p204 = pneg %p81
        %p205 = pneg %p78
        %p206 = pneg %p102
        %p207 = pneg %p99
        %p208 = pneg %p128
        %p209 = pneg %p125
        %s210 = smul.u32 2, %s18
        %p211 = scmp.lt.s32.totalorder %s210, 5
        %s212 = scalar_select %p211, %s210, 5
        %s213 = smul.addr %s212, 8
        %s214 = scalar_lea.vmem %s4, %s213
        %s215 = smul.u32 2, %s18
        %s216 = smul.u32 2, %s18
        %p217 = scmp.lt.s32.totalorder %s216, 5
        %s218 = scalar_select %p217, %s216, 5
        %s219 = smul.addr %s218, 8
        %s220 = scalar_lea.vmem %s4, %s219
        %s221 = smul.u32 2, %s18
        %v222 = vld [vmem:[%s189] sm:$0xff]
        %v223 = vld [vmem:[%s189 + $0x8] sm:$0xff]
        %v224 = vld [vmem:[%s1] sm:$0xff]
        %v225 = vld [vmem:[%s1 + $0x8] sm:$0xff]
        %v226 = vld [vmem:[%s1 + $0x10] sm:$0xff]
        %v227 = vld [vmem:[%s1 + $0x18] sm:$0xff]
        %v228 = vld [vmem:[%s1 + $0x20] sm:$0xff]
        %v229 = vld [vmem:[%s1 + $0x28] sm:$0xff]
        %v230 = vld [vmem:[%s1 + $0x30] sm:$0xff]
        %v231 = vld [vmem:[%s1 + $0x38] sm:$0xff]
        %v232 = vld [vmem:[%s1 + $0x40] sm:$0xff]
        %v233 = vld [vmem:[%s1 + $0x48] sm:$0xff]
        %v234 = vld [vmem:[%s1 + $0x50] sm:$0xff]
        %v235 = vld [vmem:[%s1 + $0x58] sm:$0xff]
        %v236 = vld [vmem:[%s1 + $0x60] sm:$0xff]
        %v237 = vld [vmem:[%s1 + $0x68] sm:$0xff]
        %v238 = vld [vmem:[%s1 + $0x70] sm:$0xff]
        %v239 = vld [vmem:[%s1 + $0x78] sm:$0xff]
        %240 = vmatpush.msra.mxu0 %v239
        %241 = vmatpush.msra.mxu0 %v238
        %242 = vmatpush.msra.mxu0 %v237
        %243 = vmatpush.msra.mxu0 %v236
        %244 = vmatpush.msra.mxu0 %v235
        %245 = vmatpush.msra.mxu0 %v234
        %246 = vmatpush.msra.mxu0 %v233
        %247 = vmatpush.msra.mxu0 %v232
        %248 = vmatpush.msra.mxu0 %v231
        %249 = vmatpush.msra.mxu0 %v230
        %250 = vmatpush.msra.mxu0 %v229
        %251 = vmatpush.msra.mxu0 %v228
        %252 = vmatpush.msra.mxu0 %v227
        %253 = vmatpush.msra.mxu0 %v226
        %254 = vmatpush.msra.mxu0 %v225
        %255 = vmatpush.msra.mxu0 %v224
        %256 = vmatmul.f32.gmra.mxu0 %v222
        %v257 = vpop.f32.mrf.mxu0
        %v258 = vadd.f32 0.0, %v257
        %259 = vmatmul.f32.gmra.mxu0 %v223
        %v260 = vpop.f32.mrf.mxu0
        %v261 = vadd.f32 0.0, %v260
        %262 = vdwg.mxu0
        %v263 = vld [vmem:[%s2] sm:$0xff]
        %v264 = vld [vmem:[%s2 + $0x8] sm:$0xff]
        %v265 = vld [vmem:[%s2 + $0x10] sm:$0xff]
        %v266 = vld [vmem:[%s2 + $0x18] sm:$0xff]
        %v267 = vld [vmem:[%s2 + $0x20] sm:$0xff]
        %v268 = vld [vmem:[%s2 + $0x28] sm:$0xff]
        %v269 = vld [vmem:[%s2 + $0x30] sm:$0xff]
        %v270 = vld [vmem:[%s2 + $0x38] sm:$0xff]
        %v271 = vld [vmem:[%s2 + $0x40] sm:$0xff]
        %v272 = vld [vmem:[%s2 + $0x48] sm:$0xff]
        %v273 = vld [vmem:[%s2 + $0x50] sm:$0xff]
        %v274 = vld [vmem:[%s2 + $0x58] sm:$0xff]
        %v275 = vld [vmem:[%s2 + $0x60] sm:$0xff]
        %v276 = vld [vmem:[%s2 + $0x68] sm:$0xff]
        %v277 = vld [vmem:[%s2 + $0x70] sm:$0xff]
        %v278 = vld [vmem:[%s2 + $0x78] sm:$0xff]
        %279 = vmatpush.msra.mxu0 %v278
        %280 = vmatpush.msra.mxu0 %v277
        %281 = vmatpush.msra.mxu0 %v276
        %282 = vmatpush.msra.mxu0 %v275
        %283 = vmatpush.msra.mxu0 %v274
        %284 = vmatpush.msra.mxu0 %v273
        %285 = vmatpush.msra.mxu0 %v272
        %286 = vmatpush.msra.mxu0 %v271
        %287 = vmatpush.msra.mxu0 %v270
        %288 = vmatpush.msra.mxu0 %v269
        %289 = vmatpush.msra.mxu0 %v268
        %290 = vmatpush.msra.mxu0 %v267
        %291 = vmatpush.msra.mxu0 %v266
        %292 = vmatpush.msra.mxu0 %v265
        %293 = vmatpush.msra.mxu0 %v264
        %294 = vmatpush.msra.mxu0 %v263
        %295 = vmatmul.f32.gmra.mxu0 %v258
        %v296 = vpop.f32.mrf.mxu0
        %v297 = vadd.f32 0.0, %v296
        %298 = vmatmul.f32.gmra.mxu0 %v261
        %v299 = vpop.f32.mrf.mxu0
        %v300 = vadd.f32 0.0, %v299
        %301 = vdwg.mxu0
        %vm302 = vcmp.gt.f32.partialorder %v297, 0.0
        %vm303 = vcmp.gt.f32.partialorder %v300, 0.0
        %v304 = vmul.f32 %v297, 0.2
        %v305 = vmul.f32 %v300, 0.2
        %v306 = vsel %vm302, %v297, %v304
        %v307 = vsel %vm303, %v300, %v305
        %310 = vrot.lane.b32.xlu0 %v306, 124
        %v311 = vpop.permute.xlu0 %310
        %312 = vrot.lane.b32.xlu0 %v307, 124
        %v313 = vpop.permute.xlu0 %312
        %v316 = vmax.f32 %v306, %v311
        %v317 = vmax.f32 %v307, %v313
        %318 = vrot.lane.b32.xlu0 %v306, 120
        %v319 = vpop.permute.xlu0 %318
        %320 = vrot.lane.b32.xlu0 %v307, 120
        %v321 = vpop.permute.xlu0 %320
        %v324 = vmax.f32 %v316, %v319
        %v325 = vmax.f32 %v317, %v321
        %326 = vrot.lane.b32.xlu0 %v306, 116
        %v327 = vpop.permute.xlu0 %326
        %328 = vrot.lane.b32.xlu0 %v307, 116
        %v329 = vpop.permute.xlu0 %328
        %v332 = vmax.f32 %v324, %v327
        %v333 = vmax.f32 %v325, %v329
        %v334 = vsub.f32 %v306, %v332
        %v335 = vsub.f32 %v307, %v333
        %v336 = vmul.f32 %v334, 1.442695
        %v337 = vpow.pop %v336
        %v338 = vmul.f32 %v335, 1.442695
        %v339 = vpow.pop %v338
        %342 = vrot.lane.b32.xlu0 %v332, 4
        %v343 = vpop.permute.xlu0 %342
        %344 = vrot.lane.b32.xlu0 %v333, 4
        %v345 = vpop.permute.xlu0 %344
        %v348 = vsub.f32 %v306, %v343
        %v349 = vsub.f32 %v307, %v345
        %v350 = vmul.f32 %v348, 1.442695
        %v351 = vpow.pop %v350
        %v352 = vmul.f32 %v349, 1.442695
        %v353 = vpow.pop %v352
        %354 = vrot.lane.b32.xlu0 %v332, 8
        %v355 = vpop.permute.xlu0 %354
        %356 = vrot.lane.b32.xlu0 %v333, 8
        %v357 = vpop.permute.xlu0 %356
        %v360 = vsub.f32 %v306, %v355
        %v361 = vsub.f32 %v307, %v357
        %v362 = vmul.f32 %v360, 1.442695
        %v363 = vpow.pop %v362
        %v364 = vmul.f32 %v361, 1.442695
        %v365 = vpow.pop %v364
        %366 = vrot.lane.b32.xlu0 %v332, 12
        %v367 = vpop.permute.xlu0 %366
        %368 = vrot.lane.b32.xlu0 %v333, 12
        %v369 = vpop.permute.xlu0 %368
        %v372 = vsub.f32 %v306, %v367
        %v373 = vsub.f32 %v307, %v369
        %v374 = vmul.f32 %v372, 1.442695
        %v375 = vpow.pop %v374
        %v376 = vmul.f32 %v373, 1.442695
        %v377 = vpow.pop %v376
        %380 = vrot.lane.b32.xlu0 %v351, 124
        %v381 = vpop.permute.xlu0 %380
        %382 = vrot.lane.b32.xlu0 %v353, 124
        %v383 = vpop.permute.xlu0 %382
        %v386 = vadd.f32 %v337, %v381
        %v387 = vadd.f32 %v339, %v383
        %390 = vrot.lane.b32.xlu0 %v363, 120
        %v391 = vpop.permute.xlu0 %390
        %392 = vrot.lane.b32.xlu0 %v365, 120
        %v393 = vpop.permute.xlu0 %392
        %v396 = vadd.f32 %v386, %v391
        %v397 = vadd.f32 %v387, %v393
        %400 = vrot.lane.b32.xlu0 %v375, 116
        %v401 = vpop.permute.xlu0 %400
        %402 = vrot.lane.b32.xlu0 %v377, 116
        %v403 = vpop.permute.xlu0 %402
        %v406 = vadd.f32 %v396, %v401
        %v407 = vadd.f32 %v397, %v403
        %v408 = vrcp.pop %v406
        %v409 = vrcp.pop %v407
        %v410 = vmul.f32 %v406, %v408
        %v411 = vmul.f32 %v407, %v409
        %v412 = vsub.f32 2.0, %v410
        %v413 = vsub.f32 2.0, %v411
        %v414 = vmul.f32 %v408, %v412
        %v415 = vmul.f32 %v409, %v413
        %v416 = vld [vmem:[%s3] sm:$0xf]
        %v417 = vmul.f32 %v337, %v414
        %v418 = vmul.f32 %v339, %v415
        %vm419 = vcmask 31744
        %v421 = vsel %vm419, %v417, 0
        %v424 = vsel %vm419, %v418, 0
        %vm426 = vcmask 1043456
        %v428 = vsel %vm426, %v416, 0
        %430 = vmatpush.msra.mxu0 0.0
        %431 = vmatpush.msra.mxu0 0.0
        %432 = vmatpush.msra.mxu0 0.0
        %433 = vmatpush.msra.mxu0 0.0
        %434 = vmatpush.msra.mxu0 0.0
        %435 = vmatpush.msra.mxu0 0.0
        %436 = vmatpush.msra.mxu0 0.0
        %437 = vmatpush.msra.mxu0 0.0
        %438 = vmatpush.msra.mxu0 0.0
        %439 = vmatpush.msra.mxu0 0.0
        %440 = vmatpush.msra.mxu0 0.0
        %441 = vmatpush.msra.mxu0 0.0
        %442 = vmatpush.msra.mxu0 0.0
        %443 = vmatpush.msra.mxu0 0.0
        %444 = vmatpush.msra.mxu0 0.0
        %445 = vmatpush.msra.mxu0 %v428
        %446 = vmatmul.f32.gmra.mxu0 %v421
        %v447 = vpop.f32.mrf.mxu0
        %v448 = vadd.f32 0.0, %v447
        %449 = vmatmul.f32.gmra.mxu0 %v424
        %v450 = vpop.f32.mrf.mxu0
        %v451 = vadd.f32 0.0, %v450
        %452 = vdwg.mxu0
        %v453 = vmul.f32 %v448, %v258
        %v454 = vmul.f32 %v451, %v261
        %457 = vrot.lane.b32.xlu0 %v414, 4
        %v458 = vpop.permute.xlu0 %457
        %459 = vrot.lane.b32.xlu0 %v415, 4
        %v460 = vpop.permute.xlu0 %459
        %v463 = vmul.f32 %v351, %v458
        %v464 = vmul.f32 %v353, %v460
        %467 = vrot.lane.b32.xlu0 %v463, 124
        %v468 = vpop.permute.xlu0 %467
        %469 = vrot.lane.b32.xlu0 %v464, 124
        %v470 = vpop.permute.xlu0 %469
        %v471 = vsel %vm419, %v468, 0
        %v473 = vsel %vm419, %v470, 0
        %475 = vmatpush.msra.mxu0 0.0
        %476 = vmatpush.msra.mxu0 0.0
        %477 = vmatpush.msra.mxu0 0.0
        %478 = vmatpush.msra.mxu0 0.0
        %479 = vmatpush.msra.mxu0 0.0
        %480 = vmatpush.msra.mxu0 0.0
        %481 = vmatpush.msra.mxu0 0.0
        %482 = vmatpush.msra.mxu0 0.0
        %483 = vmatpush.msra.mxu0 0.0
        %484 = vmatpush.msra.mxu0 0.0
        %485 = vmatpush.msra.mxu0 0.0
        %486 = vmatpush.msra.mxu0 0.0
        %487 = vmatpush.msra.mxu0 0.0
        %488 = vmatpush.msra.mxu0 0.0
        %489 = vmatpush.msra.mxu0 0.0
        %490 = vmatpush.msra.mxu0 %v428
        %491 = vmatmul.f32.gmra.mxu0 %v471
        %v492 = vpop.f32.mrf.mxu0
        %v493 = vadd.f32 0.0, %v492
        %494 = vmatmul.f32.gmra.mxu0 %v473
        %v495 = vpop.f32.mrf.mxu0
        %v496 = vadd.f32 0.0, %v495
        %497 = vdwg.mxu0
        %500 = vrot.lane.b32.xlu0 %v258, 96
        %v501 = vpop.permute.xlu0 %500
        %502 = vrot.lane.b32.xlu0 %v261, 96
        %v503 = vpop.permute.xlu0 %502
        %v506 = vmul.f32 %v493, %v501
        %v507 = vmul.f32 %v496, %v503
        %v508 = vadd.f32 %v453, %v506
        %v509 = vadd.f32 %v454, %v507
        %510 = vrot.lane.b32.xlu0 %v414, 8
        %v511 = vpop.permute.xlu0 %510
        %512 = vrot.lane.b32.xlu0 %v415, 8
        %v513 = vpop.permute.xlu0 %512
        %v516 = vmul.f32 %v363, %v511
        %v517 = vmul.f32 %v365, %v513
        %520 = vrot.lane.b32.xlu0 %v516, 120
        %v521 = vpop.permute.xlu0 %520
        %522 = vrot.lane.b32.xlu0 %v517, 120
        %v523 = vpop.permute.xlu0 %522
        %v524 = vsel %vm419, %v521, 0
        %v526 = vsel %vm419, %v523, 0
        %528 = vmatpush.msra.mxu0 0.0
        %529 = vmatpush.msra.mxu0 0.0
        %530 = vmatpush.msra.mxu0 0.0
        %531 = vmatpush.msra.mxu0 0.0
        %532 = vmatpush.msra.mxu0 0.0
        %533 = vmatpush.msra.mxu0 0.0
        %534 = vmatpush.msra.mxu0 0.0
        %535 = vmatpush.msra.mxu0 0.0
        %536 = vmatpush.msra.mxu0 0.0
        %537 = vmatpush.msra.mxu0 0.0
        %538 = vmatpush.msra.mxu0 0.0
        %539 = vmatpush.msra.mxu0 0.0
        %540 = vmatpush.msra.mxu0 0.0
        %541 = vmatpush.msra.mxu0 0.0
        %542 = vmatpush.msra.mxu0 0.0
        %543 = vmatpush.msra.mxu0 %v428
        %544 = vmatmul.f32.gmra.mxu0 %v524
        %v545 = vpop.f32.mrf.mxu0
        %v546 = vadd.f32 0.0, %v545
        %547 = vmatmul.f32.gmra.mxu0 %v526
        %v548 = vpop.f32.mrf.mxu0
        %v549 = vadd.f32 0.0, %v548
        %550 = vdwg.mxu0
        %551 = vrot.lane.b32.xlu0 %v258, 64
        %v552 = vpop.permute.xlu0 %551
        %553 = vrot.lane.b32.xlu0 %v261, 64
        %v554 = vpop.permute.xlu0 %553
        %v557 = vmul.f32 %v546, %v552
        %v558 = vmul.f32 %v549, %v554
        %v559 = vadd.f32 %v508, %v557
        %v560 = vadd.f32 %v509, %v558
        %561 = vrot.lane.b32.xlu0 %v414, 12
        %v562 = vpop.permute.xlu0 %561
        %563 = vrot.lane.b32.xlu0 %v415, 12
        %v564 = vpop.permute.xlu0 %563
        %v567 = vmul.f32 %v375, %v562
        %v568 = vmul.f32 %v377, %v564
        %571 = vrot.lane.b32.xlu0 %v567, 116
        %v572 = vpop.permute.xlu0 %571
        %573 = vrot.lane.b32.xlu0 %v568, 116
        %v574 = vpop.permute.xlu0 %573
        %v575 = vsel %vm419, %v572, 0
        %v577 = vsel %vm419, %v574, 0
        %579 = vmatpush.msra.mxu0 0.0
        %580 = vmatpush.msra.mxu0 0.0
        %581 = vmatpush.msra.mxu0 0.0
        %582 = vmatpush.msra.mxu0 0.0
        %583 = vmatpush.msra.mxu0 0.0
        %584 = vmatpush.msra.mxu0 0.0
        %585 = vmatpush.msra.mxu0 0.0
        %586 = vmatpush.msra.mxu0 0.0
        %587 = vmatpush.msra.mxu0 0.0
        %588 = vmatpush.msra.mxu0 0.0
        %589 = vmatpush.msra.mxu0 0.0
        %590 = vmatpush.msra.mxu0 0.0
        %591 = vmatpush.msra.mxu0 0.0
        %592 = vmatpush.msra.mxu0 0.0
        %593 = vmatpush.msra.mxu0 0.0
        %594 = vmatpush.msra.mxu0 %v428
        %595 = vmatmul.f32.gmra.mxu0 %v575
        %v596 = vpop.f32.mrf.mxu0
        %v597 = vadd.f32 0.0, %v596
        %598 = vmatmul.f32.gmra.mxu0 %v577
        %v599 = vpop.f32.mrf.mxu0
        %v600 = vadd.f32 0.0, %v599
        %601 = vdwg.mxu0
        %602 = vrot.lane.b32.xlu0 %v258, 32
        %v603 = vpop.permute.xlu0 %602
        %604 = vrot.lane.b32.xlu0 %v261, 32
        %v605 = vpop.permute.xlu0 %604
        %v608 = vmul.f32 %v597, %v603
        %v609 = vmul.f32 %v600, %v605
        %v610 = vadd.f32 %v559, %v608
        %v611 = vadd.f32 %v560, %v609
        %vm612 = vcmask 261120
        %613 = vst.msk [vmem:[%s220] sm:$0xff] %vm612, %v610
        %614 = vst.msk [vmem:[%s220 + $0x8] sm:$0xff] %vm612, %v611
        %s615 = smul.u32 2, %s18
        %p616 = scmp.lt.s32.totalorder %s615, 5
        %s617 = scalar_select %p616, %s615, 5
        %s618 = smul.addr %s617, 8
        %s619 = scalar_lea.vmem %s4, %s618
        // Predicated region
        $region41: #{tpu_custom_call.1} parent=35 // pred_check
          %p620 = pneg %p125
        $region42: #{tpu_custom_call.1} parent=35 // pred_check_branch
          %622 = sbr.rel (%p620) target = $region44
        $region43: #{tpu_custom_call.1} parent=35 // pred_region
          %s623 = smul.u32 2, %s18
        $region44: #{tpu_custom_call.1} parent=35 // pred_fallthru
          _
      $region36: #{tpu_custom_call.1} parent=5 // pred_fallthru
        _
      %p624 = scmp.le.s32.totalorder 2, %s13
      // Predicated region
      $region45: #{tpu_custom_call.1} parent=5 // pred_check
        %p625 = pneg %p624
      $region46: #{tpu_custom_call.1} parent=5 // pred_check_branch
        %627 = sbr.rel (%p625) target = $region48
      $region47: #{tpu_custom_call.1} parent=5 // pred_region
        %s628 = ssub.s32 %s13, 2
        // Predicated region
        $region49: #{tpu_custom_call.1} parent=47 // pred_check
          %p629 = pneg %p131
        $region50: #{tpu_custom_call.1} parent=47 // pred_check_branch
          %631 = sbr.rel (%p629) target = $region52
        $region51: #{tpu_custom_call.1} parent=47 // pred_region
          %s632 = smul.u32 2, %s19
          %p633 = scmp.lt.s32.totalorder %s632, 5
          %s634 = scalar_select %p633, %s632, 5
          %s635 = smul.addr %s634, 8
          %s636 = scalar_lea.vmem %s4, %s635
        $region52: #{tpu_custom_call.1} parent=47 // pred_fallthru
          _
      $region48: #{tpu_custom_call.1} parent=5 // pred_fallthru
        _
    $region6: #{tpu_custom_call.1} parent=1 // loop_footer
      %s17 = sadd.s32 1, %s13
    $region7: #{tpu_custom_call.1} parent=1 // loop_footer_branch
      %12 = sbr.rel target = $region3
    $region8: #{tpu_custom_call.1} parent=1 // loop_exit
      _
    %637 = vsyncpa [#allocation3], 1
    %s638 = scalar_lea.sflag [#allocation3], 1
    %639 = vsyncpa %s638, 1

</llo_original>
